<compile_context>
chip_gen: v6e
topology: v6e:2x2x1
jax: 0.10.0
libtpu: 0.0.40
codegen_flags: <defaults>
</compile_context>

<pallas_src>
import functools

import jax
import jax.numpy as jnp
from jax.experimental import pallas as pl
from jax.experimental.pallas import tpu as pltpu


def _round_up(x, m):
    return ((x + m - 1) // m) * m


# ----------------------------------------------------------------------------
# Pallas kernels
# ----------------------------------------------------------------------------
def _masked_nll_kernel(label_num, h_ref, w_ref, adj_ref, prev_ref, tgt_ref, out_ref):
    """Fused Model.loss_fn (per row-tile):
         logits = h @ W
         mask   = ones            if first timestep (prev < 0)
                = adj[prev_label] otherwise        (built via one-hot @ adj)
         mask[:, L-2] = 1
         p = exp(logits)*mask / (sum + 1e-6);  p[:, L-1] = 1
         out = -log(p[target])
    exp is computed with the row max subtracted (numerically stable; identical
    to the reference math including the 1e-6 epsilon).
    """
    logits = jnp.dot(h_ref[...], w_ref[...], preferred_element_type=jnp.float32)
    col = jax.lax.broadcasted_iota(jnp.int32, logits.shape, 1)

    prev = prev_ref[...]                                   # (TM, 1) int32
    onehot = (col == prev).astype(jnp.float32)             # all-zero when prev < 0
    mask = jnp.dot(onehot, adj_ref[...], preferred_element_type=jnp.float32)
    mask = jnp.where(prev < 0, jnp.float32(1.0), mask)     # first timestep: all ones
    mask = jnp.where(col == (label_num - 2), jnp.float32(1.0), mask)

    m = jnp.max(logits, axis=-1, keepdims=True)
    e = jnp.exp(logits - m) * mask
    # exact rewrite of (sum(exp(logits)*mask) + 1e-6) with the max factored out
    s = jnp.sum(e, axis=-1, keepdims=True) + jnp.float32(1e-6) * jnp.exp(-m)
    p = e * pl.reciprocal(s, approx=True)
    p = jnp.where(col == (label_num - 1), jnp.float32(1.0), p)

    picked = jnp.sum(jnp.where(col == tgt_ref[...], p, 0.0), axis=-1, keepdims=True)
    out_ref[...] = -jnp.log(picked)


def masked_projection_nll(h, w, adj, prev, tgt, *, tm=256):
    """h: (N, H) f32, w: (H, L) f32, adj: (L, L) f32 road adjacency counts,
    prev: (N,) int32 previous label (-1 => first timestep), tgt: (N,) int
    -> per-row NLL (N,) f32.

    Row-tiled: grid over row tiles of TM (multiple of 8), weight and adjacency
    blocks resident, row axis "parallel" for megacore sharding.
    # TODO(synk): for very large label_num, additionally tile the L axis with an
    # online-softmax accumulator so the (TM, L) tiles fit v7x's 64 MiB VMEM.
    """
    N, H = h.shape
    L = w.shape[1]
    TM = min(tm, _round_up(N, 8))
    N_pad = _round_up(N, TM)
    if N_pad != N:
        pad = N_pad - N
        h = jnp.pad(h, ((0, pad), (0, 0)))
        prev = jnp.pad(prev, ((0, pad),), constant_values=-1)
        tgt = jnp.pad(tgt, ((0, pad),), constant_values=0)
    prev2 = prev.astype(jnp.int32).reshape(N_pad, 1)
    tgt2 = tgt.astype(jnp.int32).reshape(N_pad, 1)

    kernel = functools.partial(_masked_nll_kernel, L)
    out = pl.pallas_call(
        kernel,
        grid=(pl.cdiv(N_pad, TM),),
        in_specs=[
            pl.BlockSpec((TM, H), lambda i: (i, 0)),
            pl.BlockSpec((H, L), lambda i: (0, 0)),    # weight stays resident
            pl.BlockSpec((L, L), lambda i: (0, 0)),    # adjacency stays resident
            pl.BlockSpec((TM, 1), lambda i: (i, 0)),
            pl.BlockSpec((TM, 1), lambda i: (i, 0)),
        ],
        out_specs=pl.BlockSpec((TM, 1), lambda i: (i, 0)),
        out_shape=jax.ShapeDtypeStruct((N_pad, 1), jnp.float32),
        compiler_params=pltpu.CompilerParams(dimension_semantics=("parallel",)),
    )(
        h.astype(jnp.float32),
        w.astype(jnp.float32),
        adj.astype(jnp.float32),
        prev2,
        tgt2,
    )
    return out[:N, 0]


def _logsoftmax_nll_kernel(h_ref, w_ref, tgt_ref, out_ref):
    """Fused: logits = h @ W ; log_softmax ; per-row NLL at target."""
    logits = jnp.dot(h_ref[...], w_ref[...], preferred_element_type=jnp.float32)
    m = jnp.max(logits, axis=-1, keepdims=True)
    lse = jnp.log(jnp.sum(jnp.exp(logits - m), axis=-1, keepdims=True)) + m
    logp = logits - lse
    col = jax.lax.broadcasted_iota(jnp.int32, logits.shape, 1)
    picked = jnp.sum(jnp.where(col == tgt_ref[...], logp, 0.0), axis=-1, keepdims=True)
    out_ref[...] = -picked


def logsoftmax_projection_nll(h, w, tgt, *, tm=256):
    """h: (N, H) f32, w: (H, L) f32, tgt: (N,) int -> per-row NLL (N,) f32."""
    N, H = h.shape
    L = w.shape[1]
    TM = min(tm, _round_up(N, 8))
    N_pad = _round_up(N, TM)
    if N_pad != N:
        pad = N_pad - N
        h = jnp.pad(h, ((0, pad), (0, 0)))
        tgt = jnp.pad(tgt, ((0, pad),), constant_values=0)
    tgt2 = tgt.astype(jnp.int32).reshape(N_pad, 1)

    out = pl.pallas_call(
        _logsoftmax_nll_kernel,
        grid=(pl.cdiv(N_pad, TM),),
        in_specs=[
            pl.BlockSpec((TM, H), lambda i: (i, 0)),
            pl.BlockSpec((H, L), lambda i: (0, 0)),    # weight stays resident
            pl.BlockSpec((TM, 1), lambda i: (i, 0)),
        ],
        out_specs=pl.BlockSpec((TM, 1), lambda i: (i, 0)),
        out_shape=jax.ShapeDtypeStruct((N_pad, 1), jnp.float32),
        compiler_params=pltpu.CompilerParams(dimension_semantics=("parallel",)),
    )(h.astype(jnp.float32), w.astype(jnp.float32), tgt2)
    return out[:N, 0]


# ----------------------------------------------------------------------------
# Plain-JAX glue: GRU recurrences for the (unspecified) VAE / Confidence parts
# ----------------------------------------------------------------------------
def init_gru(key, in_dim, hid):
    k1, k2, k3, k4 = jax.random.split(key, 4)
    s = 1.0 / jnp.sqrt(jnp.float32(hid))
    return dict(
        Wi=jax.random.uniform(k1, (in_dim, 3 * hid), minval=-s, maxval=s),
        Wh=jax.random.uniform(k2, (hid, 3 * hid), minval=-s, maxval=s),
        bi=jax.random.uniform(k3, (3 * hid,), minval=-s, maxval=s),
        bh=jax.random.uniform(k4, (3 * hid,), minval=-s, maxval=s),
    )


def gru_scan(p, x, h0):
    """x: (B, T, Din), h0: (B, H) -> outputs (B, T, H), last hidden (B, H).

    The input projection x @ Wi + bi is hoisted out of the recurrence as one
    large MXU-friendly matmul; only h @ Wh remains inside the scan.
    """
    B, T, Din = x.shape
    gi_all = (x.reshape(B * T, Din) @ p["Wi"] + p["bi"]).reshape(B, T, -1)
    gi_seq = jnp.swapaxes(gi_all, 0, 1)                    # (T, B, 3H)

    def step(h, gi):
        gh = h @ p["Wh"] + p["bh"]
        i_r, i_z, i_n = jnp.split(gi, 3, axis=-1)
        h_r, h_z, h_n = jnp.split(gh, 3, axis=-1)
        r = jax.nn.sigmoid(i_r + h_r)
        z = jax.nn.sigmoid(i_z + h_z)
        n = jnp.tanh(i_n + r * h_n)
        h_new = (1.0 - z) * n + z * h
        return h_new, h_new

    h_last, ys = jax.lax.scan(step, h0, gi_seq)
    return jnp.swapaxes(ys, 0, 1), h_last


def vae_forward(p, src_emb, trg_emb):
    """Simplified VAE: GRU encoder, latent (deterministic mean), GRU decoders."""
    B, _, H = src_emb.shape
    _, h = gru_scan(p["enc"], src_emb, jnp.zeros((B, H), jnp.float32))
    mean = h @ p["Wm"] + p["bm"]
    logv = h @ p["Wv"] + p["bv"]
    z = mean  # TODO(synk): eps=0 instead of sampling, for determinism
    kl_loss = -0.5 * jnp.sum(1.0 + logv - mean**2 - jnp.exp(logv), axis=-1)
    h0 = z @ p["Wl2h"] + p["bl2h"]
    p_x, _ = gru_scan(p["dec"], trg_emb[:, :-1, :], h0)      # (B, seq_len, H)
    sd_p_x, _ = gru_scan(p["sd_dec"], src_emb, h0)           # (B, 2, H)
    return kl_loss, p_x, sd_p_x


def confidence_forward(p, src):
    """Simplified Confidence: embed -> GRU -> projection -> log_softmax -> NLL."""
    B, S0 = src.shape
    H = p["emb"].shape[1]
    emb = p["emb"][src]
    out, _ = gru_scan(p["gru"], emb, jnp.zeros((B, H), jnp.float32))
    nll = logsoftmax_projection_nll(out.reshape(B * S0, H), p["proj"], src.reshape(-1))
    return nll.reshape(B, S0)


# ----------------------------------------------------------------------------
# Model
# ----------------------------------------------------------------------------
def get_adjacency(edge_list, label_num):
    """(label_num, label_num) edge-count matrix (duplicate edges accumulate,
    matching scatter_add_ in the reference get_mask)."""
    src_e, tgt_e = edge_list[0], edge_list[1]
    adj = jnp.zeros((label_num, label_num), jnp.int32).at[src_e, tgt_e].add(1)
    return adj


def init_params(key, hidden_size, label_num):
    ks = jax.random.split(key, 16)
    H, L = hidden_size, label_num
    params = dict(
        road_embedding=jax.random.normal(ks[0], (L, H), jnp.float32),
        projection_head=jax.random.normal(ks[1], (H, L), jnp.float32),
        sd_projection_head=jax.random.normal(ks[2], (H, L), jnp.float32),
        vae=dict(
            enc=init_gru(ks[3], H, H),
            dec=init_gru(ks[4], H, H),
            sd_dec=init_gru(ks[5], H, H),
            Wm=jax.random.normal(ks[6], (H, H)) * 0.1,
            bm=jnp.zeros((H,)),
            Wv=jax.random.normal(ks[7], (H, H)) * 0.1,
            bv=jnp.zeros((H,)),
            Wl2h=jax.random.normal(ks[8], (H, H)) * 0.1,
            bl2h=jnp.zeros((H,)),
        ),
        confidence=dict(
            emb=jax.random.normal(ks[9], (L, H), jnp.float32),
            gru=init_gru(ks[10], H, H),
            proj=jax.random.normal(ks[11], (H, L), jnp.float32),
        ),
        # TODO(synk): SPGNN is constructed in __init__ but never used in forward.
    )
    return params


def model_forward(params, src, trg, edge_list, src_lengths, trg_lengths, *, label_num):
    """label_num must be a static Python int (bound via functools.partial)."""
    L = label_num
    confidence = confidence_forward(params["confidence"], src)

    batch_size, seq_len = src.shape[0], src.shape[1] + 1
    cond_trg = src[jnp.arange(batch_size), (src_lengths - 1)][:, None]
    cond_src = src[:, 0][:, None]
    sd = jnp.concatenate([cond_src, cond_trg], axis=-1)        # (B, 2)
    src_emb = params["road_embedding"][sd]                     # (B, 2, H)
    label = trg[:, 1:]                                         # (B, seq_len)
    trg_emb = params["road_embedding"][trg]                    # (B, seq_len+1, H)

    kl_loss, p_x, sd_p_x = vae_forward(params["vae"], src_emb, trg_emb)

    p_x = p_x.reshape(batch_size * seq_len, -1)
    label_flat = label.reshape(-1)

    # Road-network mask is built inside the Pallas kernel from the resident
    # (L, L) adjacency; we only ship the (N,) "previous label" indices
    # (-1 for the first timestep, which maps to an all-ones mask row).
    adj = get_adjacency(edge_list, L).astype(jnp.float32)
    prev = jnp.concatenate(
        [jnp.full((batch_size, 1), -1, label.dtype), label[:, :-1]], axis=1
    ).reshape(-1)

    nll = masked_projection_nll(p_x, params["projection_head"], adj, prev, label_flat)
    nll_loss = nll.reshape(batch_size, seq_len)

    sd_p_x = sd_p_x.reshape(batch_size * 2, -1)
    sd_flat = sd.reshape(-1)
    sd_nll_per_row = logsoftmax_projection_nll(
        sd_p_x, params["sd_projection_head"], sd_flat
    )
    sd_nll_loss = 0.1 * jnp.mean(sd_nll_per_row)               # NLLLoss(mean)

    return nll_loss, kl_loss, confidence, sd_nll_loss


# ----------------------------------------------------------------------------
if __name__ == "__main__":
    key = jax.random.PRNGKey(0)
    B, S0, H, L, E = 2, 7, 32, 16, 20     # batch, src len, hidden, labels, edges
    trg_len = S0 + 2                      # so that seq_len = S0 + 1 = trg_len - 1

    k_par, k_src, k_trg, k_edge = jax.random.split(key, 4)
    params = init_params(k_par, H, L)

    src = jax.random.randint(k_src, (B, S0), 0, L - 2, dtype=jnp.int32)
    trg = jax.random.randint(k_trg, (B, trg_len), 0, L - 2, dtype=jnp.int32)
    edge_list = jax.random.randint(k_edge, (2, E), 0, L, dtype=jnp.int32)
    src_lengths = jnp.array([S0, S0 - 2], dtype=jnp.int32)
    trg_lengths = jnp.array([trg_len, trg_len - 1], dtype=jnp.int32)

    # label_num is bound statically (it determines array shapes / kernel consts).
    fwd = jax.jit(functools.partial(model_forward, label_num=L))
    outs = fwd(params, src, trg, edge_list, src_lengths, trg_lengths)
    jax.block_until_ready(outs)

    nll_loss, kl_loss, confidence, sd_nll_loss = outs
    assert nll_loss.shape == (B, S0 + 1)
    assert kl_loss.shape == (B,)
    assert confidence.shape == (B, S0)
    assert sd_nll_loss.shape == ()
    print("KERNEL_OK")
</pallas_src>

<mosaic_0001>
module attributes {stable_mosaic.version = 11 : i64} {
  func.func @_logsoftmax_nll_kernel(%arg0: i32, %arg1: memref<8x32xf32, #tpu.memory_space<vmem>>, %arg2: memref<32x16xf32, #tpu.memory_space<vmem>>, %arg3: memref<8x1xi32, #tpu.memory_space<vmem>>, %arg4: memref<8x1xf32, #tpu.memory_space<vmem>>) attributes {dimension_semantics = [#tpu.dimension_semantics<parallel>], iteration_bounds = array<i64: 1>, scalar_prefetch = 0 : i64, scratch_operands = 0 : i64, tpu.core_type = #tpu.core_type<tc>, window_params = [{transform_indices = @transform_0, window_bounds = array<i64: 8, 32>}, {pipeline_mode = #tpu.pipeline_mode<synchronous>, transform_indices = @transform_1, window_bounds = array<i64: 32, 16>}, {transform_indices = @transform_2, window_bounds = array<i64: 8, 1>}, {transform_indices = @transform_3, window_bounds = array<i64: 8, 1>}]} {
    %c0 = arith.constant 0 : index
    %c0_0 = arith.constant 0 : index
    %0 = vector.load %arg1[%c0, %c0_0] : memref<8x32xf32, #tpu.memory_space<vmem>>, vector<8x32xf32>
    %c0_1 = arith.constant 0 : index
    %c0_2 = arith.constant 0 : index
    %1 = vector.load %arg2[%c0_1, %c0_2] : memref<32x16xf32, #tpu.memory_space<vmem>>, vector<32x16xf32>
    %cst = arith.constant dense<0.000000e+00> : vector<8x16xf32>
    %2 = tpu.matmul %0, %1, %cst {dimension_numbers = #tpu.dot_dimension_numbers<[1], [0], [0], [1], [0, 0, 1, 1], [], []>} : vector<8x32xf32>, vector<32x16xf32>, vector<8x16xf32> -> vector<8x16xf32>
    %cst_3 = arith.constant dense<0xFF800000> : vector<8xf32>
    %3 = vector.multi_reduction <maximumf>, %2, %cst_3 [1] : vector<8x16xf32> to vector<8xf32>
    %4 = vector.shape_cast %3 : vector<8xf32> to vector<8x1xf32>
    %5 = vector.broadcast %4 : vector<8x1xf32> to vector<8x16xf32>
    %6 = arith.subf %2, %5 : vector<8x16xf32>
    %7 = math.exp %6 : vector<8x16xf32>
    %cst_4 = arith.constant dense<0.000000e+00> : vector<8xf32>
    %8 = vector.multi_reduction <add>, %7, %cst_4 [1] : vector<8x16xf32> to vector<8xf32>
    %9 = vector.shape_cast %8 : vector<8xf32> to vector<8x1xf32>
    %10 = math.log %9 : vector<8x1xf32>
    %11 = arith.addf %10, %4 : vector<8x1xf32>
    %12 = vector.broadcast %11 : vector<8x1xf32> to vector<8x16xf32>
    %13 = arith.subf %2, %12 : vector<8x16xf32>
    %14 = tpu.iota {dimensions = array<i32: 1>} : vector<8x16xi32>
    %c0_5 = arith.constant 0 : index
    %c0_6 = arith.constant 0 : index
    %15 = vector.load %arg3[%c0_5, %c0_6] : memref<8x1xi32, #tpu.memory_space<vmem>>, vector<8x1xi32>
    %16 = vector.broadcast %15 : vector<8x1xi32> to vector<8x16xi32>
    %17 = arith.cmpi eq, %14, %16 : vector<8x16xi32>
    %cst_7 = arith.constant 0.000000e+00 : f32
    %18 = vector.broadcast %cst_7 : f32 to vector<8x16xf32>
    %19 = arith.select %17, %13, %18 : vector<8x16xi1>, vector<8x16xf32>
    %cst_8 = arith.constant dense<0.000000e+00> : vector<8xf32>
    %20 = vector.multi_reduction <add>, %19, %cst_8 [1] : vector<8x16xf32> to vector<8xf32>
    %21 = vector.shape_cast %20 : vector<8xf32> to vector<8x1xf32>
    %cst_9 = arith.constant 0.000000e+00 : f32
    %22 = vector.broadcast %cst_9 : f32 to vector<8x1xf32>
    %23 = arith.subf %22, %21 : vector<8x1xf32>
    %c0_10 = arith.constant 0 : index
    %c0_11 = arith.constant 0 : index
    %24 = vector.load %arg4[%c0_10, %c0_11] : memref<8x1xf32, #tpu.memory_space<vmem>>, vector<8x1xf32>
    tpu.vector_store %arg4[%c0_10, %c0_11], %23 {strides = array<i32>} : memref<8x1xf32, #tpu.memory_space<vmem>>, vector<8x1xf32>,
    return
  }
  func.func @transform_0(%arg0: i32) -> (i32, i32) {
    %c0_i32 = arith.constant 0 : i32
    %c0_i32_0 = arith.constant 0 : i32
    return %arg0, %c0_i32 : i32, i32
  }
  func.func @transform_1(%arg0: i32) -> (i32, i32) {
    %c0_i32 = arith.constant 0 : i32
    %c0_i32_0 = arith.constant 0 : i32
    %c0_i32_1 = arith.constant 0 : i32
    return %c0_i32, %c0_i32_0 : i32, i32
  }
  func.func @transform_2(%arg0: i32) -> (i32, i32) {
    %c0_i32 = arith.constant 0 : i32
    %c0_i32_0 = arith.constant 0 : i32
    return %arg0, %c0_i32 : i32, i32
  }
  func.func @transform_3(%arg0: i32) -> (i32, i32) {
    %c0_i32 = arith.constant 0 : i32
    %c0_i32_0 = arith.constant 0 : i32
    return %arg0, %c0_i32 : i32, i32
  }
}

module attributes {stable_mosaic.version = 11 : i64} {
  func.func @_masked_nll_kernel(%arg0: i32, %arg1: memref<16x32xf32, #tpu.memory_space<vmem>>, %arg2: memref<32x16xf32, #tpu.memory_space<vmem>>, %arg3: memref<16x16xf32, #tpu.memory_space<vmem>>, %arg4: memref<16x1xi32, #tpu.memory_space<vmem>>, %arg5: memref<16x1xi32, #tpu.memory_space<vmem>>, %arg6: memref<16x1xf32, #tpu.memory_space<vmem>>) attributes {dimension_semantics = [#tpu.dimension_semantics<parallel>], iteration_bounds = array<i64: 1>, scalar_prefetch = 0 : i64, scratch_operands = 0 : i64, tpu.core_type = #tpu.core_type<tc>, window_params = [{transform_indices = @transform_0, window_bounds = array<i64: 16, 32>}, {pipeline_mode = #tpu.pipeline_mode<synchronous>, transform_indices = @transform_1, window_bounds = array<i64: 32, 16>}, {pipeline_mode = #tpu.pipeline_mode<synchronous>, transform_indices = @transform_2, window_bounds = array<i64: 16, 16>}, {transform_indices = @transform_3, window_bounds = array<i64: 16, 1>}, {transform_indices = @transform_4, window_bounds = array<i64: 16, 1>}, {transform_indices = @transform_5, window_bounds = array<i64: 16, 1>}]} {
    %c0 = arith.constant 0 : index
    %c0_0 = arith.constant 0 : index
    %0 = vector.load %arg1[%c0, %c0_0] : memref<16x32xf32, #tpu.memory_space<vmem>>, vector<16x32xf32>
    %c0_1 = arith.constant 0 : index
    %c0_2 = arith.constant 0 : index
    %1 = vector.load %arg2[%c0_1, %c0_2] : memref<32x16xf32, #tpu.memory_space<vmem>>, vector<32x16xf32>
    %cst = arith.constant dense<0.000000e+00> : vector<16x16xf32>
    %2 = tpu.matmul %0, %1, %cst {dimension_numbers = #tpu.dot_dimension_numbers<[1], [0], [0], [1], [0, 0, 1, 1], [], []>} : vector<16x32xf32>, vector<32x16xf32>, vector<16x16xf32> -> vector<16x16xf32>
    %3 = tpu.iota {dimensions = array<i32: 1>} : vector<16x16xi32>
    %c0_3 = arith.constant 0 : index
    %c0_4 = arith.constant 0 : index
    %4 = vector.load %arg4[%c0_3, %c0_4] : memref<16x1xi32, #tpu.memory_space<vmem>>, vector<16x1xi32>
    %5 = vector.broadcast %4 : vector<16x1xi32> to vector<16x16xi32>
    %6 = arith.cmpi eq, %3, %5 : vector<16x16xi32>
    %7 = arith.extui %6 : vector<16x16xi1> to vector<16x16xi32>
    %8 = arith.sitofp %7 : vector<16x16xi32> to vector<16x16xf32>
    %c0_5 = arith.constant 0 : index
    %c0_6 = arith.constant 0 : index
    %9 = vector.load %arg3[%c0_5, %c0_6] : memref<16x16xf32, #tpu.memory_space<vmem>>, vector<16x16xf32>
    %cst_7 = arith.constant dense<0.000000e+00> : vector<16x16xf32>
    %10 = tpu.matmul %8, %9, %cst_7 {dimension_numbers = #tpu.dot_dimension_numbers<[1], [0], [0], [1], [0, 0, 1, 1], [], []>} : vector<16x16xf32>, vector<16x16xf32>, vector<16x16xf32> -> vector<16x16xf32>
    %c0_i32 = arith.constant 0 : i32
    %11 = vector.broadcast %c0_i32 : i32 to vector<16x1xi32>
    %12 = arith.cmpi slt, %4, %11 : vector<16x1xi32>
    %cst_8 = arith.constant 1.000000e+00 : f32
    %13 = vector.shape_cast %12 : vector<16x1xi1> to vector<16x1xi1>
    %14 = vector.broadcast %13 : vector<16x1xi1> to vector<16x16xi1>
    %15 = vector.broadcast %cst_8 : f32 to vector<16x16xf32>
    %16 = arith.select %14, %15, %10 : vector<16x16xi1>, vector<16x16xf32>
    %c14_i32 = arith.constant 14 : i32
    %17 = vector.broadcast %c14_i32 : i32 to vector<16x16xi32>
    %18 = arith.cmpi eq, %3, %17 : vector<16x16xi32>
    %cst_9 = arith.constant 1.000000e+00 : f32
    %19 = vector.broadcast %cst_9 : f32 to vector<16x16xf32>
    %20 = arith.select %18, %19, %16 : vector<16x16xi1>, vector<16x16xf32>
    %cst_10 = arith.constant dense<0xFF800000> : vector<16xf32>
    %21 = vector.multi_reduction <maximumf>, %2, %cst_10 [1] : vector<16x16xf32> to vector<16xf32>
    %22 = vector.shape_cast %21 : vector<16xf32> to vector<16x1xf32>
    %23 = vector.broadcast %22 : vector<16x1xf32> to vector<16x16xf32>
    %24 = arith.subf %2, %23 : vector<16x16xf32>
    %25 = math.exp %24 : vector<16x16xf32>
    %26 = arith.mulf %25, %20 : vector<16x16xf32>
    %cst_11 = arith.constant dense<0.000000e+00> : vector<16xf32>
    %27 = vector.multi_reduction <add>, %26, %cst_11 [1] : vector<16x16xf32> to vector<16xf32>
    %28 = vector.shape_cast %27 : vector<16xf32> to vector<16x1xf32>
    %cst_12 = arith.constant 0.000000e+00 : f32
    %29 = vector.broadcast %cst_12 : f32 to vector<16x1xf32>
    %30 = arith.subf %29, %22 : vector<16x1xf32>
    %31 = math.exp %30 : vector<16x1xf32>
    %cst_13 = arith.constant 9.99999997E-7 : f32
    %32 = vector.broadcast %cst_13 : f32 to vector<16x1xf32>
    %33 = arith.mulf %32, %31 : vector<16x1xf32>
    %34 = arith.addf %28, %33 : vector<16x1xf32>
    %35 = tpu.reciprocal %34 {approx = true} : vector<16x1xf32> -> vector<16x1xf32>
    %36 = vector.broadcast %35 : vector<16x1xf32> to vector<16x16xf32>
    %37 = arith.mulf %26, %36 : vector<16x16xf32>
    %c15_i32 = arith.constant 15 : i32
    %38 = vector.broadcast %c15_i32 : i32 to vector<16x16xi32>
    %39 = arith.cmpi eq, %3, %38 : vector<16x16xi32>
    %cst_14 = arith.constant 1.000000e+00 : f32
    %40 = vector.broadcast %cst_14 : f32 to vector<16x16xf32>
    %41 = arith.select %39, %40, %37 : vector<16x16xi1>, vector<16x16xf32>
    %c0_15 = arith.constant 0 : index
    %c0_16 = arith.constant 0 : index
    %42 = vector.load %arg5[%c0_15, %c0_16] : memref<16x1xi32, #tpu.memory_space<vmem>>, vector<16x1xi32>
    %43 = vector.broadcast %42 : vector<16x1xi32> to vector<16x16xi32>
    %44 = arith.cmpi eq, %3, %43 : vector<16x16xi32>
    %cst_17 = arith.constant 0.000000e+00 : f32
    %45 = vector.broadcast %cst_17 : f32 to vector<16x16xf32>
    %46 = arith.select %44, %41, %45 : vector<16x16xi1>, vector<16x16xf32>
    %cst_18 = arith.constant dense<0.000000e+00> : vector<16xf32>
    %47 = vector.multi_reduction <add>, %46, %cst_18 [1] : vector<16x16xf32> to vector<16xf32>
    %48 = vector.shape_cast %47 : vector<16xf32> to vector<16x1xf32>
    %49 = math.log %48 : vector<16x1xf32>
    %cst_19 = arith.constant 0.000000e+00 : f32
    %50 = vector.broadcast %cst_19 : f32 to vector<16x1xf32>
    %51 = arith.subf %50, %49 : vector<16x1xf32>
    %c0_20 = arith.constant 0 : index
    %c0_21 = arith.constant 0 : index
    %52 = vector.load %arg6[%c0_20, %c0_21] : memref<16x1xf32, #tpu.memory_space<vmem>>, vector<16x1xf32>
    tpu.vector_store %arg6[%c0_20, %c0_21], %51 {strides = array<i32>} : memref<16x1xf32, #tpu.memory_space<vmem>>, vector<16x1xf32>,
    return
  }
  func.func @transform_0(%arg0: i32) -> (i32, i32) {
    %c0_i32 = arith.constant 0 : i32
    %c0_i32_0 = arith.constant 0 : i32
    return %arg0, %c0_i32 : i32, i32
  }
  func.func @transform_1(%arg0: i32) -> (i32, i32) {
    %c0_i32 = arith.constant 0 : i32
    %c0_i32_0 = arith.constant 0 : i32
    %c0_i32_1 = arith.constant 0 : i32
    return %c0_i32, %c0_i32_0 : i32, i32
  }
  func.func @transform_2(%arg0: i32) -> (i32, i32) {
    %c0_i32 = arith.constant 0 : i32
    %c0_i32_0 = arith.constant 0 : i32
    %c0_i32_1 = arith.constant 0 : i32
    return %c0_i32, %c0_i32_0 : i32, i32
  }
  func.func @transform_3(%arg0: i32) -> (i32, i32) {
    %c0_i32 = arith.constant 0 : i32
    %c0_i32_0 = arith.constant 0 : i32
    return %arg0, %c0_i32 : i32, i32
  }
  func.func @transform_4(%arg0: i32) -> (i32, i32) {
    %c0_i32 = arith.constant 0 : i32
    %c0_i32_0 = arith.constant 0 : i32
    return %arg0, %c0_i32 : i32, i32
  }
  func.func @transform_5(%arg0: i32) -> (i32, i32) {
    %c0_i32 = arith.constant 0 : i32
    %c0_i32_0 = arith.constant 0 : i32
    return %arg0, %c0_i32 : i32, i32
  }
}

module attributes {stable_mosaic.version = 11 : i64} {
  func.func @_logsoftmax_nll_kernel(%arg0: i32, %arg1: memref<16x32xf32, #tpu.memory_space<vmem>>, %arg2: memref<32x16xf32, #tpu.memory_space<vmem>>, %arg3: memref<16x1xi32, #tpu.memory_space<vmem>>, %arg4: memref<16x1xf32, #tpu.memory_space<vmem>>) attributes {dimension_semantics = [#tpu.dimension_semantics<parallel>], iteration_bounds = array<i64: 1>, scalar_prefetch = 0 : i64, scratch_operands = 0 : i64, tpu.core_type = #tpu.core_type<tc>, window_params = [{transform_indices = @transform_0, window_bounds = array<i64: 16, 32>}, {pipeline_mode = #tpu.pipeline_mode<synchronous>, transform_indices = @transform_1, window_bounds = array<i64: 32, 16>}, {transform_indices = @transform_2, window_bounds = array<i64: 16, 1>}, {transform_indices = @transform_3, window_bounds = array<i64: 16, 1>}]} {
    %c0 = arith.constant 0 : index
    %c0_0 = arith.constant 0 : index
    %0 = vector.load %arg1[%c0, %c0_0] : memref<16x32xf32, #tpu.memory_space<vmem>>, vector<16x32xf32>
    %c0_1 = arith.constant 0 : index
    %c0_2 = arith.constant 0 : index
    %1 = vector.load %arg2[%c0_1, %c0_2] : memref<32x16xf32, #tpu.memory_space<vmem>>, vector<32x16xf32>
    %cst = arith.constant dense<0.000000e+00> : vector<16x16xf32>
    %2 = tpu.matmul %0, %1, %cst {dimension_numbers = #tpu.dot_dimension_numbers<[1], [0], [0], [1], [0, 0, 1, 1], [], []>} : vector<16x32xf32>, vector<32x16xf32>, vector<16x16xf32> -> vector<16x16xf32>
    %cst_3 = arith.constant dense<0xFF800000> : vector<16xf32>
    %3 = vector.multi_reduction <maximumf>, %2, %cst_3 [1] : vector<16x16xf32> to vector<16xf32>
    %4 = vector.shape_cast %3 : vector<16xf32> to vector<16x1xf32>
    %5 = vector.broadcast %4 : vector<16x1xf32> to vector<16x16xf32>
    %6 = arith.subf %2, %5 : vector<16x16xf32>
    %7 = math.exp %6 : vector<16x16xf32>
    %cst_4 = arith.constant dense<0.000000e+00> : vector<16xf32>
    %8 = vector.multi_reduction <add>, %7, %cst_4 [1] : vector<16x16xf32> to vector<16xf32>
    %9 = vector.shape_cast %8 : vector<16xf32> to vector<16x1xf32>
    %10 = math.log %9 : vector<16x1xf32>
    %11 = arith.addf %10, %4 : vector<16x1xf32>
    %12 = vector.broadcast %11 : vector<16x1xf32> to vector<16x16xf32>
    %13 = arith.subf %2, %12 : vector<16x16xf32>
    %14 = tpu.iota {dimensions = array<i32: 1>} : vector<16x16xi32>
    %c0_5 = arith.constant 0 : index
    %c0_6 = arith.constant 0 : index
    %15 = vector.load %arg3[%c0_5, %c0_6] : memref<16x1xi32, #tpu.memory_space<vmem>>, vector<16x1xi32>
    %16 = vector.broadcast %15 : vector<16x1xi32> to vector<16x16xi32>
    %17 = arith.cmpi eq, %14, %16 : vector<16x16xi32>
    %cst_7 = arith.constant 0.000000e+00 : f32
    %18 = vector.broadcast %cst_7 : f32 to vector<16x16xf32>
    %19 = arith.select %17, %13, %18 : vector<16x16xi1>, vector<16x16xf32>
    %cst_8 = arith.constant dense<0.000000e+00> : vector<16xf32>
    %20 = vector.multi_reduction <add>, %19, %cst_8 [1] : vector<16x16xf32> to vector<16xf32>
    %21 = vector.shape_cast %20 : vector<16xf32> to vector<16x1xf32>
    %cst_9 = arith.constant 0.000000e+00 : f32
    %22 = vector.broadcast %cst_9 : f32 to vector<16x1xf32>
    %23 = arith.subf %22, %21 : vector<16x1xf32>
    %c0_10 = arith.constant 0 : index
    %c0_11 = arith.constant 0 : index
    %24 = vector.load %arg4[%c0_10, %c0_11] : memref<16x1xf32, #tpu.memory_space<vmem>>, vector<16x1xf32>
    tpu.vector_store %arg4[%c0_10, %c0_11], %23 {strides = array<i32>} : memref<16x1xf32, #tpu.memory_space<vmem>>, vector<16x1xf32>,
    return
  }
  func.func @transform_0(%arg0: i32) -> (i32, i32) {
    %c0_i32 = arith.constant 0 : i32
    %c0_i32_0 = arith.constant 0 : i32
    return %arg0, %c0_i32 : i32, i32
  }
  func.func @transform_1(%arg0: i32) -> (i32, i32) {
    %c0_i32 = arith.constant 0 : i32
    %c0_i32_0 = arith.constant 0 : i32
    %c0_i32_1 = arith.constant 0 : i32
    return %c0_i32, %c0_i32_0 : i32, i32
  }
  func.func @transform_2(%arg0: i32) -> (i32, i32) {
    %c0_i32 = arith.constant 0 : i32
    %c0_i32_0 = arith.constant 0 : i32
    return %arg0, %c0_i32 : i32, i32
  }
  func.func @transform_3(%arg0: i32) -> (i32, i32) {
    %c0_i32 = arith.constant 0 : i32
    %c0_i32_0 = arith.constant 0 : i32
    return %arg0, %c0_i32 : i32, i32
  }
}

</mosaic_0001>

<llo_original>
// kernel: custom-call.5
$region0: #{custom-call.5}
  %s0 = inlined_call_operand.vmem [shape: f32[2,32], index: 0, kind: output, shape index: {}]

// kernel: custom-call.13
$region0: #{custom-call.13}
  %s0 = inlined_call_operand.vmem [shape: f32[2,2,32], index: 0, kind: output, shape index: {}]

// kernel: custom-call.12
$region0: #{custom-call.12}
  %s0 = inlined_call_operand.vmem [shape: f32[8,2,32], index: 0, kind: output, shape index: {}]

// kernel: squeeze.16
$region0: #{squeeze.16}
  %s0 = inlined_call_operand.vmem [shape: f32[16], index: 0, kind: input, shape index: {}]
  %s1 = inlined_call_operand.hbm [shape: f32[2,8], index: 1, kind: output, shape index: {}]
  $region1: #{squeeze.16} parent=0
    #allocation0 [shape = 'u8[1024]{0}', space=vmem, size = 0x400, scoped, tag = 'operand span for operand 1']
    #allocation1 [shape = 's32[1]{0}', space=sflag, size = 0x4, scoped, tag = 'scoped memory for squeeze.16']
    #allocation2 [shape = 'u8[4096]{0}', space=vmem, size = 0x1000, scoped, tag = 'scoped mem for output reshape']
    #allocation3 [shape = 'u8[4096]{0}', space=vmem, size = 0x1000, scoped, tag = 'scoped mem for input reshape']
    %2 = vsyncpa [#allocation1], 0
    %s4 = sshll.u32 1, 1
    %s5 = ssub.s32 %s4, 1
    %v6 = vld [vmem:[%s0] sm:%s5]
    %7 = vst [vmem:[#allocation3] sm:%s5] %v6
    %v8 = vld [vmem:[#allocation3] sm:$0x1]
    %vm9 = vcmask 64512
    %10 = vst.msk [vmem:[#allocation2] sm:$0x1] %vm9, %v8
    %v11 = vld [vmem:[#allocation3] sm:$0x1]
    %12 = vrot.lane.b32.xlu0 %v11, 120
    %v13 = vpop.permute.xlu0 %12
    %vm14 = vcmask 64512
    %s15 = scalar_lea.vmem [#allocation2], 1
    %16 = vst.msk [vmem:[%s15] sm:$0x1] %vm14, %v13
    %s18 = sshll.u32 1, 2
    %s19 = ssub.s32 %s18, 1
    %v21 = vld [vmem:[#allocation2] sm:%s19]
    %s22 = sshll.u32 1, 2
    %s23 = ssub.s32 %s22, 1
    %24 = vst [vmem:[#allocation0] sm:%s23] %v21
    %s26 = ssub.s32 32, 32
    %27 = vsyncadd [#allocation1], %s26
    %s29 = sshll.u32 [#allocation0], 4
    %s30 = int_to_ptr.vmem [resolvable:$true] %s29
    %32 = dma.vmem_to_hbm [thread:$0]  %s30, 32, %s1, [#allocation1]
    %33 = dma.done [#allocation1], 32
    %34 = vsyncpa [#allocation1], 1

// kernel: model_forward.5
$region0: #{model_forward.5}
  #allocation0 [shape = 'u32[]', space=smem, size = 0x4, offset = 0x4, fixed_abs, tag = 'smem constant byte address 0x4 - core index']
  #allocation1 [shape = 'u32[144,128]{1,0:T(1,128)}', space=vmem, size = 0x12000, scoped, tag = 'internal scratch']
  %s0 = inlined_call_operand.vmem [shape: f32[8,32], index: 0, kind: input, shape index: {}]
  %s1 = inlined_call_operand.vmem [shape: f32[32,16], index: 1, kind: input, shape index: {}]
  %s2 = inlined_call_operand.vmem [shape: s32[8,1], index: 2, kind: input, shape index: {}]
  %s3 = inlined_call_operand.vmem [shape: f32[8,1], index: 3, kind: output, shape index: {}]
  %s4 = sld [smem:[#allocation0]]
  $region22: #{model_forward.5} parent=0
    _
  %s6 = ssub.s32 1, %s4
  %s7 = scalar_select 0, %s6, %s4
  // Predicated region
  $region2: #{model_forward.5} parent=0 // pred_check
    _
  $region3: #{model_forward.5} parent=0 // pred_check_branch
    %9 = sbr.rel (0) target = $region5
  $region4: #{model_forward.5} parent=0 // pred_region
    _
  $region5: #{model_forward.5} parent=0 // pred_fallthru
    _
  // Predicated region
  $region6: #{model_forward.5} parent=0 // pred_check
    _
  $region7: #{model_forward.5} parent=0 // pred_check_branch
    %11 = sbr.rel (0) target = $region9
  $region8: #{model_forward.5} parent=0 // pred_region
    _
  $region9: #{model_forward.5} parent=0 // pred_fallthru
    _
  // Predicated region
  $region10: #{model_forward.5} parent=0 // pred_check
    _
  $region11: #{model_forward.5} parent=0 // pred_check_branch
    %13 = sbr.rel (0) target = $region13
  $region12: #{model_forward.5} parent=0 // pred_region
    _
  $region13: #{model_forward.5} parent=0 // pred_fallthru
    _
  %v14 = vld [vmem:[%s0] sm:$0xff]
  %v15 = vld [vmem:[%s1] sm:$0xff]
  %v16 = vld [vmem:[%s1 + $0x8] sm:$0xff]
  %v17 = vld [vmem:[%s1 + $0x10] sm:$0xff]
  %v18 = vld [vmem:[%s1 + $0x18] sm:$0xff]
  %vm19 = vcmask 261120
  %v21 = vsel %vm19, %v14, 0
  %23 = vmatprep.subr.mxu0 0.0
  %24 = vmatpush1.msra.mxu0 0.0
  %25 = vmatprep.subr.mxu0 0.0
  %26 = vmatpush1.msra.mxu0 0.0
  %27 = vmatprep.subr.mxu0 0.0
  %28 = vmatpush1.msra.mxu0 0.0
  %29 = vmatprep.subr.mxu0 0.0
  %30 = vmatpush1.msra.mxu0 0.0
  %31 = vmatprep.subr.mxu0 0.0
  %32 = vmatpush1.msra.mxu0 0.0
  %33 = vmatprep.subr.mxu0 0.0
  %34 = vmatpush1.msra.mxu0 0.0
  %35 = vmatprep.subr.mxu0 0.0
  %36 = vmatpush1.msra.mxu0 0.0
  %37 = vmatprep.subr.mxu0 0.0
  %38 = vmatpush1.msra.mxu0 0.0
  %39 = vmatprep.subr.mxu0 0.0
  %40 = vmatpush1.msra.mxu0 0.0
  %41 = vmatprep.subr.mxu0 0.0
  %42 = vmatpush1.msra.mxu0 0.0
  %43 = vmatprep.subr.mxu0 0.0
  %44 = vmatpush1.msra.mxu0 0.0
  %45 = vmatprep.subr.mxu0 0.0
  %46 = vmatpush1.msra.mxu0 0.0
  %47 = vmatprep.subr.mxu0 0.0
  %48 = vmatpush1.msra.mxu0 %v18
  %49 = vmatprep.subr.mxu0 0.0
  %50 = vmatpush1.msra.mxu0 %v17
  %51 = vmatprep.subr.mxu0 0.0
  %52 = vmatpush1.msra.mxu0 %v16
  %53 = vmatprep.subr.mxu0 0.0
  %54 = vmatpush1.msra.mxu0 %v15
  %55 = vmatprep.subr.mxu0 0.0
  %56 = vmatpush2.msra.mxu0 0.0
  %57 = vmatprep.subr.mxu0 0.0
  %58 = vmatpush2.msra.mxu0 0.0
  %59 = vmatprep.subr.mxu0 0.0
  %60 = vmatpush2.msra.mxu0 0.0
  %61 = vmatprep.subr.mxu0 0.0
  %62 = vmatpush2.msra.mxu0 0.0
  %63 = vmatprep.subr.mxu0 0.0
  %64 = vmatpush2.msra.mxu0 0.0
  %65 = vmatprep.subr.mxu0 0.0
  %66 = vmatpush2.msra.mxu0 0.0
  %67 = vmatprep.subr.mxu0 0.0
  %68 = vmatpush2.msra.mxu0 0.0
  %69 = vmatprep.subr.mxu0 0.0
  %70 = vmatpush2.msra.mxu0 0.0
  %71 = vmatprep.subr.mxu0 0.0
  %72 = vmatpush2.msra.mxu0 0.0
  %73 = vmatprep.subr.mxu0 0.0
  %74 = vmatpush2.msra.mxu0 0.0
  %75 = vmatprep.subr.mxu0 0.0
  %76 = vmatpush2.msra.mxu0 0.0
  %77 = vmatprep.subr.mxu0 0.0
  %78 = vmatpush2.msra.mxu0 0.0
  %79 = vmatprep.subr.mxu0 0.0
  %80 = vmatpush2.msra.mxu0 0.0
  %81 = vmatprep.subr.mxu0 0.0
  %82 = vmatpush2.msra.mxu0 0.0
  %83 = vmatprep.subr.mxu0 0.0
  %84 = vmatpush2.msra.mxu0 0.0
  %85 = vmatprep.subr.mxu0 0.0
  %86 = vmatpush2.msra.mxu0 0.0
  %87 = vmatprep.mubr.f32.mxu0 0.0
  %88 = vmatmul.mubr.f32.gmra.mxu0 %v21
  %v89 = vpop.f32.mrf.mxu0
  %v90 = vadd.f32 0.0, %v89
  %v91 = vpop.f32.mrf.mxu0
  %92 = vdwg.mxu0
  %vm93 = vcmask 130048
  %v94 = vsel %vm93, %v90, -inf
  %95 = vmax.xlane.f32.xlu0 %v94
  %v96 = vpop.xlane.xlu0 %95
  %v97 = vsub.f32 %v90, %v96
  %v98 = vmul.f32 %v97, 1.442695
  %v99 = vpow.pop %v98
  %v100 = vsel %vm93, %v99, 0.0
  %101 = vadd.xlane.f32.xlu0 %v100
  %v102 = vpop.xlane.xlu0 %101
  %v103 = vlog2.pop %v102
  %v104 = vmul.f32 %v103, 0.6931472
  %v105 = vadd.f32 %v104, %v96
  %v106 = vsub.f32 %v90, %v105
  %v107 = vlaneseq
  %v108 = vand.u32 %v107, 127
  %v109 = vld [vmem:[%s2] sm:$0xff]
  %110 = vset.pattern.permute.xlu0 0
  %111 = vperm.xlu0 %110, %v109
  %v112 = vpop.permute.xlu0 %111
  %vm113 = vcmp.eq.s32.totalorder %v108, %v112
  %v114 = vsel %vm113, %v106, 0.0
  %v115 = vsel %vm93, %v114, 0.0
  %116 = vadd.xlane.f32.xlu0 %v115
  %v117 = vpop.xlane.xlu0 %116
  %v118 = vsub.f32 0.0, %v117
  %vm119 = vcmask 7168
  %120 = vst.msk [vmem:[%s3] sm:$0xff] %vm119, %v118
  // Predicated region
  $region14: #{model_forward.5} parent=0 // pred_check
    _
  $region15: #{model_forward.5} parent=0 // pred_check_branch
    %122 = sbr.rel (0) target = $region17
  $region16: #{model_forward.5} parent=0 // pred_region
    _
  $region17: #{model_forward.5} parent=0 // pred_fallthru
    _
  // Predicated region
  $region18: #{model_forward.5} parent=0 // pred_check
    _
  $region19: #{model_forward.5} parent=0 // pred_check_branch
    %124 = sbr.rel (0) target = $region21
  $region20: #{model_forward.5} parent=0 // pred_region
    _
  $region21: #{model_forward.5} parent=0 // pred_fallthru
    _

// kernel: custom-call.14
$region0: #{custom-call.14}
  %s0 = inlined_call_operand.vmem [shape: f32[7,2,32], index: 0, kind: output, shape index: {}]

// kernel: squeeze.13
$region0: #{squeeze.13}
  %s0 = inlined_call_operand.vmem [shape: f32[14], index: 0, kind: input, shape index: {}]
  %s1 = inlined_call_operand.hbm [shape: f32[2,7], index: 1, kind: output, shape index: {}]
  $region1: #{squeeze.13} parent=0
    #allocation0 [shape = 'u8[1024]{0}', space=vmem, size = 0x400, scoped, tag = 'operand span for operand 1']
    #allocation1 [shape = 's32[1]{0}', space=sflag, size = 0x4, scoped, tag = 'scoped memory for squeeze.13']
    #allocation2 [shape = 'u8[4096]{0}', space=vmem, size = 0x1000, scoped, tag = 'scoped mem for output reshape']
    #allocation3 [shape = 'u8[4096]{0}', space=vmem, size = 0x1000, scoped, tag = 'scoped mem for input reshape']
    %2 = vsyncpa [#allocation1], 0
    %s4 = sshll.u32 1, 1
    %s5 = ssub.s32 %s4, 1
    %v6 = vld [vmem:[%s0] sm:%s5]
    %7 = vst [vmem:[#allocation3] sm:%s5] %v6
    %v8 = vld [vmem:[#allocation3] sm:$0x1]
    %vm9 = vcmask 56320
    %10 = vst.msk [vmem:[#allocation2] sm:$0x1] %vm9, %v8
    %v11 = vld [vmem:[#allocation3] sm:$0x1]
    %12 = vrot.lane.b32.xlu0 %v11, 121
    %v13 = vpop.permute.xlu0 %12
    %vm14 = vcmask 56320
    %s15 = scalar_lea.vmem [#allocation2], 1
    %16 = vst.msk [vmem:[%s15] sm:$0x1] %vm14, %v13
    %s18 = sshll.u32 1, 2
    %s19 = ssub.s32 %s18, 1
    %v21 = vld [vmem:[#allocation2] sm:%s19]
    %s22 = sshll.u32 1, 2
    %s23 = ssub.s32 %s22, 1
    %24 = vst [vmem:[#allocation0] sm:%s23] %v21
    %s26 = ssub.s32 32, 32
    %27 = vsyncadd [#allocation1], %s26
    %s29 = sshll.u32 [#allocation0], 4
    %s30 = int_to_ptr.vmem [resolvable:$true] %s29
    %32 = dma.vmem_to_hbm [thread:$0]  %s30, 32, %s1, [#allocation1]
    %33 = dma.done [#allocation1], 32
    %34 = vsyncpa [#allocation1], 1

// kernel: model_forward.4
$region0: #{model_forward.4}
  #allocation0 [shape = 'u32[]', space=smem, size = 0x4, offset = 0x4, fixed_abs, tag = 'smem constant byte address 0x4 - core index']
  #allocation1 [shape = 'u32[144,128]{1,0:T(1,128)}', space=vmem, size = 0x12000, scoped, tag = 'internal scratch']
  %s0 = inlined_call_operand.vmem [shape: f32[16,32], index: 0, kind: input, shape index: {}]
  %s1 = inlined_call_operand.vmem [shape: f32[32,16], index: 1, kind: input, shape index: {}]
  %s2 = inlined_call_operand.vmem [shape: f32[16,16], index: 2, kind: input, shape index: {}]
  %s3 = inlined_call_operand.vmem [shape: s32[16,1], index: 3, kind: input, shape index: {}]
  %s4 = inlined_call_operand.vmem [shape: s32[16,1], index: 4, kind: input, shape index: {}]
  %s5 = inlined_call_operand.vmem [shape: f32[16,1], index: 5, kind: output, shape index: {}]
  %s6 = sld [smem:[#allocation0]]
  $region30: #{model_forward.4} parent=0
    _
  %s8 = ssub.s32 1, %s6
  %s9 = scalar_select 0, %s8, %s6
  // Predicated region
  $region2: #{model_forward.4} parent=0 // pred_check
    _
  $region3: #{model_forward.4} parent=0 // pred_check_branch
    %11 = sbr.rel (0) target = $region5
  $region4: #{model_forward.4} parent=0 // pred_region
    _
  $region5: #{model_forward.4} parent=0 // pred_fallthru
    _
  // Predicated region
  $region6: #{model_forward.4} parent=0 // pred_check
    _
  $region7: #{model_forward.4} parent=0 // pred_check_branch
    %13 = sbr.rel (0) target = $region9
  $region8: #{model_forward.4} parent=0 // pred_region
    _
  $region9: #{model_forward.4} parent=0 // pred_fallthru
    _
  // Predicated region
  $region10: #{model_forward.4} parent=0 // pred_check
    _
  $region11: #{model_forward.4} parent=0 // pred_check_branch
    %15 = sbr.rel (0) target = $region13
  $region12: #{model_forward.4} parent=0 // pred_region
    _
  $region13: #{model_forward.4} parent=0 // pred_fallthru
    _
  // Predicated region
  $region14: #{model_forward.4} parent=0 // pred_check
    _
  $region15: #{model_forward.4} parent=0 // pred_check_branch
    %17 = sbr.rel (0) target = $region17
  $region16: #{model_forward.4} parent=0 // pred_region
    _
  $region17: #{model_forward.4} parent=0 // pred_fallthru
    _
  // Predicated region
  $region18: #{model_forward.4} parent=0 // pred_check
    _
  $region19: #{model_forward.4} parent=0 // pred_check_branch
    %19 = sbr.rel (0) target = $region21
  $region20: #{model_forward.4} parent=0 // pred_region
    _
  $region21: #{model_forward.4} parent=0 // pred_fallthru
    _
  %v20 = vld [vmem:[%s0] sm:$0xff]
  %v21 = vld [vmem:[%s0 + $0x8] sm:$0xff]
  %v22 = vld [vmem:[%s1] sm:$0xff]
  %v23 = vld [vmem:[%s1 + $0x8] sm:$0xff]
  %v24 = vld [vmem:[%s1 + $0x10] sm:$0xff]
  %v25 = vld [vmem:[%s1 + $0x18] sm:$0xff]
  %vm26 = vcmask 261120
  %v28 = vsel %vm26, %v20, 0
  %v31 = vsel %vm26, %v21, 0
  %33 = vmatprep.subr.mxu0 0.0
  %34 = vmatpush1.msra.mxu0 0.0
  %35 = vmatprep.subr.mxu0 0.0
  %36 = vmatpush1.msra.mxu0 0.0
  %37 = vmatprep.subr.mxu0 0.0
  %38 = vmatpush1.msra.mxu0 0.0
  %39 = vmatprep.subr.mxu0 0.0
  %40 = vmatpush1.msra.mxu0 0.0
  %41 = vmatprep.subr.mxu0 0.0
  %42 = vmatpush1.msra.mxu0 0.0
  %43 = vmatprep.subr.mxu0 0.0
  %44 = vmatpush1.msra.mxu0 0.0
  %45 = vmatprep.subr.mxu0 0.0
  %46 = vmatpush1.msra.mxu0 0.0
  %47 = vmatprep.subr.mxu0 0.0
  %48 = vmatpush1.msra.mxu0 0.0
  %49 = vmatprep.subr.mxu0 0.0
  %50 = vmatpush1.msra.mxu0 0.0
  %51 = vmatprep.subr.mxu0 0.0
  %52 = vmatpush1.msra.mxu0 0.0
  %53 = vmatprep.subr.mxu0 0.0
  %54 = vmatpush1.msra.mxu0 0.0
  %55 = vmatprep.subr.mxu0 0.0
  %56 = vmatpush1.msra.mxu0 0.0
  %57 = vmatprep.subr.mxu0 0.0
  %58 = vmatpush1.msra.mxu0 %v25
  %59 = vmatprep.subr.mxu0 0.0
  %60 = vmatpush1.msra.mxu0 %v24
  %61 = vmatprep.subr.mxu0 0.0
  %62 = vmatpush1.msra.mxu0 %v23
  %63 = vmatprep.subr.mxu0 0.0
  %64 = vmatpush1.msra.mxu0 %v22
  %65 = vmatprep.subr.mxu0 0.0
  %66 = vmatpush2.msra.mxu0 0.0
  %67 = vmatprep.subr.mxu0 0.0
  %68 = vmatpush2.msra.mxu0 0.0
  %69 = vmatprep.subr.mxu0 0.0
  %70 = vmatpush2.msra.mxu0 0.0
  %71 = vmatprep.subr.mxu0 0.0
  %72 = vmatpush2.msra.mxu0 0.0
  %73 = vmatprep.subr.mxu0 0.0
  %74 = vmatpush2.msra.mxu0 0.0
  %75 = vmatprep.subr.mxu0 0.0
  %76 = vmatpush2.msra.mxu0 0.0
  %77 = vmatprep.subr.mxu0 0.0
  %78 = vmatpush2.msra.mxu0 0.0
  %79 = vmatprep.subr.mxu0 0.0
  %80 = vmatpush2.msra.mxu0 0.0
  %81 = vmatprep.subr.mxu0 0.0
  %82 = vmatpush2.msra.mxu0 0.0
  %83 = vmatprep.subr.mxu0 0.0
  %84 = vmatpush2.msra.mxu0 0.0
  %85 = vmatprep.subr.mxu0 0.0
  %86 = vmatpush2.msra.mxu0 0.0
  %87 = vmatprep.subr.mxu0 0.0
  %88 = vmatpush2.msra.mxu0 0.0
  %89 = vmatprep.subr.mxu0 0.0
  %90 = vmatpush2.msra.mxu0 0.0
  %91 = vmatprep.subr.mxu0 0.0
  %92 = vmatpush2.msra.mxu0 0.0
  %93 = vmatprep.subr.mxu0 0.0
  %94 = vmatpush2.msra.mxu0 0.0
  %95 = vmatprep.subr.mxu0 0.0
  %96 = vmatpush2.msra.mxu0 0.0
  %97 = vmatprep.mubr.f32.mxu0 0.0
  %98 = vmatmul.mubr.f32.gmra.mxu0 %v28
  %v99 = vpop.f32.mrf.mxu0
  %v100 = vadd.f32 0.0, %v99
  %v101 = vpop.f32.mrf.mxu0
  %102 = vmatprep.mubr.f32.mxu0 0.0
  %103 = vmatmul.mubr.f32.gmra.mxu0 %v31
  %v104 = vpop.f32.mrf.mxu0
  %v105 = vadd.f32 0.0, %v104
  %v106 = vpop.f32.mrf.mxu0
  %107 = vdwg.mxu0
  %v108 = vlaneseq
  %v109 = vand.u32 %v108, 127
  %v110 = vld [vmem:[%s3] sm:$0xff]
  %v111 = vld [vmem:[%s3 + $0x8] sm:$0xff]
  %112 = vset.pattern.permute.xlu0 0
  %113 = vperm.xlu0 %112, %v110
  %v114 = vpop.permute.xlu0 %113
  %115 = vset.pattern.permute.xlu0 0
  %116 = vperm.xlu0 %115, %v111
  %v117 = vpop.permute.xlu0 %116
  %vm118 = vcmp.eq.s32.totalorder %v109, %v114
  %vm119 = vcmp.eq.s32.totalorder %v109, %v117
  %v120 = vsel %vm118, 1, 0
  %v121 = vsel %vm119, 1, 0
  %v122 = vcvt.s32.f32 %v120
  %v123 = vcvt.s32.f32 %v121
  %v124 = vld [vmem:[%s2] sm:$0xff]
  %v125 = vld [vmem:[%s2 + $0x8] sm:$0xff]
  %vm126 = vcmask 130048
  %v128 = vsel %vm126, %v122, 0
  %v131 = vsel %vm126, %v123, 0
  %133 = vmatprep.subr.mxu0 0.0
  %134 = vmatpush1.msra.mxu0 0.0
  %135 = vmatprep.subr.mxu0 0.0
  %136 = vmatpush1.msra.mxu0 0.0
  %137 = vmatprep.subr.mxu0 0.0
  %138 = vmatpush1.msra.mxu0 0.0
  %139 = vmatprep.subr.mxu0 0.0
  %140 = vmatpush1.msra.mxu0 0.0
  %141 = vmatprep.subr.mxu0 0.0
  %142 = vmatpush1.msra.mxu0 0.0
  %143 = vmatprep.subr.mxu0 0.0
  %144 = vmatpush1.msra.mxu0 0.0
  %145 = vmatprep.subr.mxu0 0.0
  %146 = vmatpush1.msra.mxu0 0.0
  %147 = vmatprep.subr.mxu0 0.0
  %148 = vmatpush1.msra.mxu0 0.0
  %149 = vmatprep.subr.mxu0 0.0
  %150 = vmatpush1.msra.mxu0 0.0
  %151 = vmatprep.subr.mxu0 0.0
  %152 = vmatpush1.msra.mxu0 0.0
  %153 = vmatprep.subr.mxu0 0.0
  %154 = vmatpush1.msra.mxu0 0.0
  %155 = vmatprep.subr.mxu0 0.0
  %156 = vmatpush1.msra.mxu0 0.0
  %157 = vmatprep.subr.mxu0 0.0
  %158 = vmatpush1.msra.mxu0 0.0
  %159 = vmatprep.subr.mxu0 0.0
  %160 = vmatpush1.msra.mxu0 0.0
  %161 = vmatprep.subr.mxu0 0.0
  %162 = vmatpush1.msra.mxu0 %v125
  %163 = vmatprep.subr.mxu0 0.0
  %164 = vmatpush1.msra.mxu0 %v124
  %165 = vmatprep.subr.mxu0 0.0
  %166 = vmatpush2.msra.mxu0 0.0
  %167 = vmatprep.subr.mxu0 0.0
  %168 = vmatpush2.msra.mxu0 0.0
  %169 = vmatprep.subr.mxu0 0.0
  %170 = vmatpush2.msra.mxu0 0.0
  %171 = vmatprep.subr.mxu0 0.0
  %172 = vmatpush2.msra.mxu0 0.0
  %173 = vmatprep.subr.mxu0 0.0
  %174 = vmatpush2.msra.mxu0 0.0
  %175 = vmatprep.subr.mxu0 0.0
  %176 = vmatpush2.msra.mxu0 0.0
  %177 = vmatprep.subr.mxu0 0.0
  %178 = vmatpush2.msra.mxu0 0.0
  %179 = vmatprep.subr.mxu0 0.0
  %180 = vmatpush2.msra.mxu0 0.0
  %181 = vmatprep.subr.mxu0 0.0
  %182 = vmatpush2.msra.mxu0 0.0
  %183 = vmatprep.subr.mxu0 0.0
  %184 = vmatpush2.msra.mxu0 0.0
  %185 = vmatprep.subr.mxu0 0.0
  %186 = vmatpush2.msra.mxu0 0.0
  %187 = vmatprep.subr.mxu0 0.0
  %188 = vmatpush2.msra.mxu0 0.0
  %189 = vmatprep.subr.mxu0 0.0
  %190 = vmatpush2.msra.mxu0 0.0
  %191 = vmatprep.subr.mxu0 0.0
  %192 = vmatpush2.msra.mxu0 0.0
  %193 = vmatprep.subr.mxu0 0.0
  %194 = vmatpush2.msra.mxu0 0.0
  %195 = vmatprep.subr.mxu0 0.0
  %196 = vmatpush2.msra.mxu0 0.0
  %197 = vmatprep.mubr.f32.mxu0 0.0
  %198 = vmatmul.mubr.f32.gmra.mxu0 %v128
  %v199 = vpop.f32.mrf.mxu0
  %v200 = vadd.f32 0.0, %v199
  %v201 = vpop.f32.mrf.mxu0
  %202 = vmatprep.mubr.f32.mxu0 0.0
  %203 = vmatmul.mubr.f32.gmra.mxu0 %v131
  %v204 = vpop.f32.mrf.mxu0
  %v205 = vadd.f32 0.0, %v204
  %v206 = vpop.f32.mrf.mxu0
  %207 = vdwg.mxu0
  %vm208 = vcmp.lt.s32.totalorder %v110, 0
  %vm209 = vcmp.lt.s32.totalorder %v111, 0
  %v210 = vsel %vm208, 1, 0
  %v211 = vsel %vm209, 1, 0
  %212 = vset.pattern.permute.xlu0 0
  %213 = vperm.xlu0 %212, %v210
  %v214 = vpop.permute.xlu0 %213
  %215 = vset.pattern.permute.xlu0 0
  %216 = vperm.xlu0 %215, %v211
  %v217 = vpop.permute.xlu0 %216
  %vm218 = vcmp.eq.s32.totalorder %v214, 1
  %vm219 = vcmp.eq.s32.totalorder %v217, 1
  %v220 = vsel %vm218, 1.0, %v200
  %v221 = vsel %vm219, 1.0, %v205
  %vm222 = vcmp.eq.s32.totalorder %v109, 14
  %v223 = vsel %vm222, 1.0, %v220
  %v224 = vsel %vm222, 1.0, %v221
  %v225 = vsel %vm126, %v100, -inf
  %226 = vmax.xlane.f32.xlu0 %v225
  %v227 = vpop.xlane.xlu0 %226
  %v228 = vsel %vm126, %v105, -inf
  %229 = vmax.xlane.f32.xlu0 %v228
  %v230 = vpop.xlane.xlu0 %229
  %v231 = vsub.f32 %v100, %v227
  %v232 = vsub.f32 %v105, %v230
  %v233 = vmul.f32 %v231, 1.442695
  %v234 = vpow.pop %v233
  %v235 = vmul.f32 %v232, 1.442695
  %v236 = vpow.pop %v235
  %v237 = vmul.f32 %v234, %v223
  %v238 = vmul.f32 %v236, %v224
  %v239 = vsel %vm126, %v237, 0.0
  %240 = vadd.xlane.f32.xlu0 %v239
  %v241 = vpop.xlane.xlu0 %240
  %v242 = vsel %vm126, %v238, 0.0
  %243 = vadd.xlane.f32.xlu0 %v242
  %v244 = vpop.xlane.xlu0 %243
  %v245 = vsub.f32 0.0, %v227
  %v246 = vsub.f32 0.0, %v230
  %v247 = vmul.f32 %v245, 1.442695
  %v248 = vpow.pop %v247
  %v249 = vmul.f32 %v246, 1.442695
  %v250 = vpow.pop %v249
  %v251 = vmul.f32 %v248, 1e-06
  %v252 = vmul.f32 %v250, 1e-06
  %v253 = vadd.f32 %v241, %v251
  %v254 = vadd.f32 %v244, %v252
  %v255 = vrcp.pop %v253
  %v256 = vrcp.pop %v254
  %v257 = vmul.f32 %v237, %v255
  %v258 = vmul.f32 %v238, %v256
  %vm259 = vcmp.eq.s32.totalorder %v109, 15
  %v260 = vsel %vm259, 1.0, %v257
  %v261 = vsel %vm259, 1.0, %v258
  %v262 = vld [vmem:[%s4] sm:$0xff]
  %v263 = vld [vmem:[%s4 + $0x8] sm:$0xff]
  %264 = vset.pattern.permute.xlu0 0
  %265 = vperm.xlu0 %264, %v262
  %v266 = vpop.permute.xlu0 %265
  %267 = vset.pattern.permute.xlu0 0
  %268 = vperm.xlu0 %267, %v263
  %v269 = vpop.permute.xlu0 %268
  %vm270 = vcmp.eq.s32.totalorder %v109, %v266
  %vm271 = vcmp.eq.s32.totalorder %v109, %v269
  %v272 = vsel %vm270, %v260, 0.0
  %v273 = vsel %vm271, %v261, 0.0
  %v274 = vsel %vm126, %v272, 0.0
  %275 = vadd.xlane.f32.xlu0 %v274
  %v276 = vpop.xlane.xlu0 %275
  %v277 = vsel %vm126, %v273, 0.0
  %278 = vadd.xlane.f32.xlu0 %v277
  %v279 = vpop.xlane.xlu0 %278
  %v280 = vlog2.pop %v276
  %v281 = vmul.f32 %v280, 0.6931472
  %v282 = vlog2.pop %v279
  %v283 = vmul.f32 %v282, 0.6931472
  %v284 = vsub.f32 0.0, %v281
  %v285 = vsub.f32 0.0, %v283
  %vm286 = vcmask 7168
  %287 = vst.msk [vmem:[%s5] sm:$0xff] %vm286, %v284
  %288 = vst.msk [vmem:[%s5 + $0x8] sm:$0xff] %vm286, %v285
  // Predicated region
  $region22: #{model_forward.4} parent=0 // pred_check
    _
  $region23: #{model_forward.4} parent=0 // pred_check_branch
    %290 = sbr.rel (0) target = $region25
  $region24: #{model_forward.4} parent=0 // pred_region
    _
  $region25: #{model_forward.4} parent=0 // pred_fallthru
    _
  // Predicated region
  $region26: #{model_forward.4} parent=0 // pred_check
    _
  $region27: #{model_forward.4} parent=0 // pred_check_branch
    %292 = sbr.rel (0) target = $region29
  $region28: #{model_forward.4} parent=0 // pred_region
    _
  $region29: #{model_forward.4} parent=0 // pred_fallthru
    _

// kernel: model_forward.3
$region0: #{model_forward.3}
  #allocation0 [shape = 'u32[]', space=smem, size = 0x4, offset = 0x4, fixed_abs, tag = 'smem constant byte address 0x4 - core index']
  #allocation1 [shape = 'u32[144,128]{1,0:T(1,128)}', space=vmem, size = 0x12000, scoped, tag = 'internal scratch']
  %s0 = inlined_call_operand.vmem [shape: f32[16,32], index: 0, kind: input, shape index: {}]
  %s1 = inlined_call_operand.vmem [shape: f32[32,16], index: 1, kind: input, shape index: {}]
  %s2 = inlined_call_operand.vmem [shape: s32[16,1], index: 2, kind: input, shape index: {}]
  %s3 = inlined_call_operand.vmem [shape: f32[16,1], index: 3, kind: output, shape index: {}]
  %s4 = sld [smem:[#allocation0]]
  $region22: #{model_forward.3} parent=0
    _
  %s6 = ssub.s32 1, %s4
  %s7 = scalar_select 0, %s6, %s4
  // Predicated region
  $region2: #{model_forward.3} parent=0 // pred_check
    _
  $region3: #{model_forward.3} parent=0 // pred_check_branch
    %9 = sbr.rel (0) target = $region5
  $region4: #{model_forward.3} parent=0 // pred_region
    _
  $region5: #{model_forward.3} parent=0 // pred_fallthru
    _
  // Predicated region
  $region6: #{model_forward.3} parent=0 // pred_check
    _
  $region7: #{model_forward.3} parent=0 // pred_check_branch
    %11 = sbr.rel (0) target = $region9
  $region8: #{model_forward.3} parent=0 // pred_region
    _
  $region9: #{model_forward.3} parent=0 // pred_fallthru
    _
  // Predicated region
  $region10: #{model_forward.3} parent=0 // pred_check
    _
  $region11: #{model_forward.3} parent=0 // pred_check_branch
    %13 = sbr.rel (0) target = $region13
  $region12: #{model_forward.3} parent=0 // pred_region
    _
  $region13: #{model_forward.3} parent=0 // pred_fallthru
    _
  %v14 = vld [vmem:[%s0] sm:$0xff]
  %v15 = vld [vmem:[%s0 + $0x8] sm:$0xff]
  %v16 = vld [vmem:[%s1] sm:$0xff]
  %v17 = vld [vmem:[%s1 + $0x8] sm:$0xff]
  %v18 = vld [vmem:[%s1 + $0x10] sm:$0xff]
  %v19 = vld [vmem:[%s1 + $0x18] sm:$0xff]
  %vm20 = vcmask 261120
  %v22 = vsel %vm20, %v14, 0
  %v25 = vsel %vm20, %v15, 0
  %27 = vmatprep.subr.mxu0 0.0
  %28 = vmatpush1.msra.mxu0 0.0
  %29 = vmatprep.subr.mxu0 0.0
  %30 = vmatpush1.msra.mxu0 0.0
  %31 = vmatprep.subr.mxu0 0.0
  %32 = vmatpush1.msra.mxu0 0.0
  %33 = vmatprep.subr.mxu0 0.0
  %34 = vmatpush1.msra.mxu0 0.0
  %35 = vmatprep.subr.mxu0 0.0
  %36 = vmatpush1.msra.mxu0 0.0
  %37 = vmatprep.subr.mxu0 0.0
  %38 = vmatpush1.msra.mxu0 0.0
  %39 = vmatprep.subr.mxu0 0.0
  %40 = vmatpush1.msra.mxu0 0.0
  %41 = vmatprep.subr.mxu0 0.0
  %42 = vmatpush1.msra.mxu0 0.0
  %43 = vmatprep.subr.mxu0 0.0
  %44 = vmatpush1.msra.mxu0 0.0
  %45 = vmatprep.subr.mxu0 0.0
  %46 = vmatpush1.msra.mxu0 0.0
  %47 = vmatprep.subr.mxu0 0.0
  %48 = vmatpush1.msra.mxu0 0.0
  %49 = vmatprep.subr.mxu0 0.0
  %50 = vmatpush1.msra.mxu0 0.0
  %51 = vmatprep.subr.mxu0 0.0
  %52 = vmatpush1.msra.mxu0 %v19
  %53 = vmatprep.subr.mxu0 0.0
  %54 = vmatpush1.msra.mxu0 %v18
  %55 = vmatprep.subr.mxu0 0.0
  %56 = vmatpush1.msra.mxu0 %v17
  %57 = vmatprep.subr.mxu0 0.0
  %58 = vmatpush1.msra.mxu0 %v16
  %59 = vmatprep.subr.mxu0 0.0
  %60 = vmatpush2.msra.mxu0 0.0
  %61 = vmatprep.subr.mxu0 0.0
  %62 = vmatpush2.msra.mxu0 0.0
  %63 = vmatprep.subr.mxu0 0.0
  %64 = vmatpush2.msra.mxu0 0.0
  %65 = vmatprep.subr.mxu0 0.0
  %66 = vmatpush2.msra.mxu0 0.0
  %67 = vmatprep.subr.mxu0 0.0
  %68 = vmatpush2.msra.mxu0 0.0
  %69 = vmatprep.subr.mxu0 0.0
  %70 = vmatpush2.msra.mxu0 0.0
  %71 = vmatprep.subr.mxu0 0.0
  %72 = vmatpush2.msra.mxu0 0.0
  %73 = vmatprep.subr.mxu0 0.0
  %74 = vmatpush2.msra.mxu0 0.0
  %75 = vmatprep.subr.mxu0 0.0
  %76 = vmatpush2.msra.mxu0 0.0
  %77 = vmatprep.subr.mxu0 0.0
  %78 = vmatpush2.msra.mxu0 0.0
  %79 = vmatprep.subr.mxu0 0.0
  %80 = vmatpush2.msra.mxu0 0.0
  %81 = vmatprep.subr.mxu0 0.0
  %82 = vmatpush2.msra.mxu0 0.0
  %83 = vmatprep.subr.mxu0 0.0
  %84 = vmatpush2.msra.mxu0 0.0
  %85 = vmatprep.subr.mxu0 0.0
  %86 = vmatpush2.msra.mxu0 0.0
  %87 = vmatprep.subr.mxu0 0.0
  %88 = vmatpush2.msra.mxu0 0.0
  %89 = vmatprep.subr.mxu0 0.0
  %90 = vmatpush2.msra.mxu0 0.0
  %91 = vmatprep.mubr.f32.mxu0 0.0
  %92 = vmatmul.mubr.f32.gmra.mxu0 %v22
  %v93 = vpop.f32.mrf.mxu0
  %v94 = vadd.f32 0.0, %v93
  %v95 = vpop.f32.mrf.mxu0
  %96 = vmatprep.mubr.f32.mxu0 0.0
  %97 = vmatmul.mubr.f32.gmra.mxu0 %v25
  %v98 = vpop.f32.mrf.mxu0
  %v99 = vadd.f32 0.0, %v98
  %v100 = vpop.f32.mrf.mxu0
  %101 = vdwg.mxu0
  %vm102 = vcmask 130048
  %v103 = vsel %vm102, %v94, -inf
  %104 = vmax.xlane.f32.xlu0 %v103
  %v105 = vpop.xlane.xlu0 %104
  %v106 = vsel %vm102, %v99, -inf
  %107 = vmax.xlane.f32.xlu0 %v106
  %v108 = vpop.xlane.xlu0 %107
  %v109 = vsub.f32 %v94, %v105
  %v110 = vsub.f32 %v99, %v108
  %v111 = vmul.f32 %v109, 1.442695
  %v112 = vpow.pop %v111
  %v113 = vmul.f32 %v110, 1.442695
  %v114 = vpow.pop %v113
  %v115 = vsel %vm102, %v112, 0.0
  %116 = vadd.xlane.f32.xlu0 %v115
  %v117 = vpop.xlane.xlu0 %116
  %v118 = vsel %vm102, %v114, 0.0
  %119 = vadd.xlane.f32.xlu0 %v118
  %v120 = vpop.xlane.xlu0 %119
  %v121 = vlog2.pop %v117
  %v122 = vmul.f32 %v121, 0.6931472
  %v123 = vlog2.pop %v120
  %v124 = vmul.f32 %v123, 0.6931472
  %v125 = vadd.f32 %v122, %v105
  %v126 = vadd.f32 %v124, %v108
  %v127 = vsub.f32 %v94, %v125
  %v128 = vsub.f32 %v99, %v126
  %v129 = vlaneseq
  %v130 = vand.u32 %v129, 127
  %v131 = vld [vmem:[%s2] sm:$0xff]
  %v132 = vld [vmem:[%s2 + $0x8] sm:$0xff]
  %133 = vset.pattern.permute.xlu0 0
  %134 = vperm.xlu0 %133, %v131
  %v135 = vpop.permute.xlu0 %134
  %136 = vset.pattern.permute.xlu0 0
  %137 = vperm.xlu0 %136, %v132
  %v138 = vpop.permute.xlu0 %137
  %vm139 = vcmp.eq.s32.totalorder %v130, %v135
  %vm140 = vcmp.eq.s32.totalorder %v130, %v138
  %v141 = vsel %vm139, %v127, 0.0
  %v142 = vsel %vm140, %v128, 0.0
  %v143 = vsel %vm102, %v141, 0.0
  %144 = vadd.xlane.f32.xlu0 %v143
  %v145 = vpop.xlane.xlu0 %144
  %v146 = vsel %vm102, %v142, 0.0
  %147 = vadd.xlane.f32.xlu0 %v146
  %v148 = vpop.xlane.xlu0 %147
  %v149 = vsub.f32 0.0, %v145
  %v150 = vsub.f32 0.0, %v148
  %vm151 = vcmask 7168
  %152 = vst.msk [vmem:[%s3] sm:$0xff] %vm151, %v149
  %153 = vst.msk [vmem:[%s3 + $0x8] sm:$0xff] %vm151, %v150
  // Predicated region
  $region14: #{model_forward.3} parent=0 // pred_check
    _
  $region15: #{model_forward.3} parent=0 // pred_check_branch
    %155 = sbr.rel (0) target = $region17
  $region16: #{model_forward.3} parent=0 // pred_region
    _
  $region17: #{model_forward.3} parent=0 // pred_fallthru
    _
  // Predicated region
  $region18: #{model_forward.3} parent=0 // pred_check
    _
  $region19: #{model_forward.3} parent=0 // pred_check_branch
    %157 = sbr.rel (0) target = $region21
  $region20: #{model_forward.3} parent=0 // pred_region
    _
  $region21: #{model_forward.3} parent=0 // pred_fallthru
    _

</llo_original>
